<compile_context>
chip_gen: v7x
topology: tpu7x:2x2x1
jax: 0.10.0
libtpu: 0.0.40
codegen_flags: <defaults>
</compile_context>

<pallas_src>
import functools

import jax
import jax.numpy as jnp
from jax import lax
from jax.experimental import pallas as pl
from jax.experimental.pallas import tpu as pltpu


def _gelu(x, approximate):
    if approximate:
        # tanh approximation: transcendental goes to the EUP slot.
        c = 0.7978845608028654  # sqrt(2/pi)
        return 0.5 * x * (1.0 + jnp.tanh(c * (x + 0.044715 * x * x * x)))
    # PyTorch nn.GELU() default = exact (erf-based) GELU.
    return 0.5 * x * (1.0 + lax.erf(x * 0.7071067811865476))


def axiom_system_kernel(stmt_ref, ax_ref,
                        w1s_ref, w1a_ref, b1_ref, w2_ref, b2_ref,
                        wc1_ref, bc1_ref, wc2_ref, bc2_ref,
                        scores_ref, conseq_ref, *, gelu_approximate=False):
    B, H = stmt_ref.shape
    At = ax_ref.shape[0]                       # A-tile (== A when gridless)
    mm_dtype = w1s_ref.dtype                   # f32, or bf16 MXU-operand path

    s = stmt_ref[...]                          # (B, H)  f32
    ax = ax_ref[...]                           # (At, H) f32

    # --- axiom_applicability: Linear(2H->H) split into stmt/axiom halves ----
    h_s = jnp.dot(s.astype(mm_dtype), w1s_ref[...],
                  preferred_element_type=jnp.float32)             # (B, H)
    h_a = jnp.dot(ax.astype(mm_dtype), w1a_ref[...],
                  preferred_element_type=jnp.float32)             # (At, H)
    h1 = h_s[:, None, :] + h_a[None, :, :] + b1_ref[...]          # (B, At, H)
    g1 = _gelu(h1, gelu_approximate)

    # Linear(H->1) head: VPU multiply + lane (XLU) reduction, not an N=1 MXU
    # matmul.  keepdims keeps scores in (B, At, 1) layout so the broadcast
    # multiply below needs no lane<->sublane relayout.
    logits = jnp.sum(g1 * w2_ref[...], axis=-1, keepdims=True) + b2_ref[0]
    scores = jax.nn.sigmoid(logits)                               # (B, At, 1)

    # --- axiom_consequence, with the score factored out of the first matmul:
    #     weighted @ wc1 == scores * (ax @ wc1)   (scores is scalar per (b,a))
    axc1 = jnp.dot(ax.astype(mm_dtype), wc1_ref[...],
                   preferred_element_type=jnp.float32)            # (At, H)
    c1 = _gelu(scores * axc1[None, :, :] + bc1_ref[...],
               gelu_approximate)                                  # (B, At, H)
    conseq = (jnp.dot(c1.reshape(B * At, H).astype(mm_dtype), wc2_ref[...],
                      preferred_element_type=jnp.float32)
              + bc2_ref[...]).reshape(B, At, H)

    scores_ref[...] = scores[:, :, 0]          # squeeze once, on the store
    conseq_ref[...] = conseq                   # (B, At, H)


def axiom_system_forward(statement, axioms, params, *,
                         matmul_dtype=jnp.float32,
                         gelu_approximate=False,
                         a_tile=None):
    """Returns (applicability_scores [B,A], consequence [B,A,H], uncertainty [B,A])."""
    B, H = statement.shape
    A = axioms.shape[0]
    w1s, w1a, b1, w2_row, b2, wc1, bc1, wc2, bc2 = params

    if a_tile is None:
        a_tile = A
    assert A % a_tile == 0, "A must be divisible by a_tile"
    n_a = A // a_tile

    # Only the MXU operands are narrowed (bf16 is full-rate on v5e/v6e/v7x
    # MXUs); biases and the VPU-side head row stay f32, accumulation stays f32.
    w1s_m, w1a_m = w1s.astype(matmul_dtype), w1a.astype(matmul_dtype)
    wc1_m, wc2_m = wc1.astype(matmul_dtype), wc2.astype(matmul_dtype)

    inv = lambda ai: (0, 0)                    # grid-invariant blocks
    in_specs = [
        pl.BlockSpec((B, H), inv),                           # statement
        pl.BlockSpec((a_tile, H), lambda ai: (ai, 0)),       # axioms (tiled)
        pl.BlockSpec((H, H), inv),                           # w1s
        pl.BlockSpec((H, H), inv),                           # w1a
        pl.BlockSpec((1, H), inv),                           # b1
        pl.BlockSpec((1, H), inv),                           # w2 row
        pl.BlockSpec(memory_space=pltpu.MemorySpace.SMEM),   # b2 scalar (1,)
        pl.BlockSpec((H, H), inv),                           # wc1
        pl.BlockSpec((1, H), inv),                           # bc1
        pl.BlockSpec((H, H), inv),                           # wc2
        pl.BlockSpec((1, H), inv),                           # bc2
    ]
    out_specs = (
        pl.BlockSpec((B, a_tile), lambda ai: (0, ai)),         # scores
        pl.BlockSpec((B, a_tile, H), lambda ai: (0, ai, 0)),   # consequence
    )

    w_bytes = jnp.dtype(matmul_dtype).itemsize
    flops = (2 * B * H * H          # applicability layer-1, statement half
             + 2 * A * H * H        # applicability layer-1, axiom half
             + 2 * A * H * H        # axc1 = axioms @ wc1 (factored, B-free)
             + 2 * B * A * H        # applicability head reduction
             + 2 * B * A * H * H    # consequence second matmul
             + 10 * B * A * H)      # elementwise
    cost = pl.CostEstimate(
        flops=flops,
        transcendentals=2 * B * A * H + B * A,   # 2x GELU + sigmoid
        bytes_accessed=(4 * (B * H + A * H + 4 * H + 1 + B * A + B * A * H)
                        + w_bytes * 4 * H * H))

    kernel = functools.partial(axiom_system_kernel,
                               gelu_approximate=gelu_approximate)

    scores, conseq = pl.pallas_call(
        kernel,
        grid=(n_a,),
        out_shape=(jax.ShapeDtypeStruct((B, A), jnp.float32),
                   jax.ShapeDtypeStruct((B, A, H), jnp.float32)),
        in_specs=in_specs,
        out_specs=out_specs,
        compiler_params=pltpu.CompilerParams(
            dimension_semantics=("parallel",)),
        cost_estimate=cost,
    )(statement, axioms, w1s_m, w1a_m, b1, w2_row, b2, wc1_m, bc1, wc2_m, bc2)

    # Uncertainty is a trivial elementwise function of the scores; compute it
    # in the wrapper instead of emitting a third (narrow) kernel output.
    uncertainty = 1.0 - 2.0 * jnp.abs(scores - 0.5)
    return scores, conseq, uncertainty


def reference_forward(statement, axioms, params):
    """Pure-JAX mirror of the PyTorch forward (for correctness checking)."""
    w1s, w1a, b1, w2_row, b2, wc1, bc1, wc2, bc2 = params
    B, H = statement.shape
    A = axioms.shape[0]
    exp_s = jnp.broadcast_to(statement[:, None, :], (B, A, H))
    exp_a = jnp.broadcast_to(axioms[None], (B, A, H))
    combined = jnp.concatenate([exp_s, exp_a], axis=2)            # (B, A, 2H)
    w1 = jnp.concatenate([w1s, w1a], axis=0)                      # (2H, H)
    h1 = jax.nn.gelu(combined @ w1 + b1[0], approximate=False)
    logits = jnp.einsum('bah,h->ba', h1, w2_row[0]) + b2[0]
    scores = jax.nn.sigmoid(logits)                               # (B, A)
    weighted = exp_a * scores[..., None]
    c1 = jax.nn.gelu(weighted @ wc1 + bc1[0], approximate=False)
    conseq = c1 @ wc2 + bc2[0]
    unc = 1.0 - 2.0 * jnp.abs(scores - 0.5)
    return scores, conseq, unc


if __name__ == "__main__":
    # Small, TPU-friendly config: batch=2, hidden=32, num_axioms=16.
    B, H, A = 2, 32, 16
    key = jax.random.PRNGKey(0)
    ks = jax.random.split(key, 12)

    statement = jax.random.normal(ks[0], (B, H), jnp.float32)
    axioms = jax.random.normal(ks[1], (A, H), jnp.float32)      # nn.Parameter(randn)

    s1 = 1.0 / (2 * H) ** 0.5   # fan_in = 2H for applicability layer 1
    s2 = 1.0 / H ** 0.5
    params = (
        jax.random.normal(ks[2], (H, H), jnp.float32) * s1,     # w1s (statement half)
        jax.random.normal(ks[3], (H, H), jnp.float32) * s1,     # w1a (axiom half)
        jax.random.normal(ks[4], (1, H), jnp.float32) * s1,     # b1
        jax.random.normal(ks[5], (1, H), jnp.float32) * s2,     # w2 (row vector)
        jax.random.normal(ks[6], (1,), jnp.float32) * s2,       # b2 (1-D SMEM scalar)
        jax.random.normal(ks[7], (H, H), jnp.float32) * s2,     # wc1
        jax.random.normal(ks[8], (1, H), jnp.float32) * s2,     # bc1
        jax.random.normal(ks[9], (H, H), jnp.float32) * s2,     # wc2
        jax.random.normal(ks[10], (1, H), jnp.float32) * s2,    # bc2
    )

    r_scores, r_conseq, r_unc = reference_forward(statement, axioms, params)

    # f32 MXU operands, exact GELU — matches PyTorch f32 semantics.
    scores, conseq, unc = jax.block_until_ready(
        axiom_system_forward(statement, axioms, params))
    assert scores.shape == (B, A)
    assert conseq.shape == (B, A, H)
    assert unc.shape == (B, A)
    assert jnp.allclose(scores, r_scores, atol=1e-3, rtol=1e-3)
    assert jnp.allclose(conseq, r_conseq, atol=1e-3, rtol=1e-3)
    assert jnp.allclose(unc, r_unc, atol=1e-3, rtol=1e-3)

    # bf16 MXU-operand path (throughput lever on all three chips); f32
    # accumulation keeps the result close to the f32 reference.
    s16, c16, _ = jax.block_until_ready(
        axiom_system_forward(statement, axioms, params,
                             matmul_dtype=jnp.bfloat16))
    assert jnp.allclose(s16, r_scores, atol=5e-2, rtol=5e-2)
    assert jnp.allclose(c16, r_conseq, atol=5e-2, rtol=5e-2)

    # tanh-approx GELU path (EUP transcendental; VALU relief at small H).
    sa, ca, _ = jax.block_until_ready(
        axiom_system_forward(statement, axioms, params, gelu_approximate=True))
    assert jnp.allclose(sa, r_scores, atol=5e-2, rtol=5e-2)
    assert jnp.allclose(ca, r_conseq, atol=5e-2, rtol=5e-2)

    print("KERNEL_OK")
</pallas_src>

<mosaic_0001>
module attributes {stable_mosaic.version = 11 : i64} {
  func.func @axiom_system_kernel(%arg0: i32, %arg1: memref<2x32xf32, #tpu.memory_space<vmem>>, %arg2: memref<16x32xf32, #tpu.memory_space<vmem>>, %arg3: memref<32x32xf32, #tpu.memory_space<vmem>>, %arg4: memref<32x32xf32, #tpu.memory_space<vmem>>, %arg5: memref<1x32xf32, #tpu.memory_space<vmem>>, %arg6: memref<1x32xf32, #tpu.memory_space<vmem>>, %arg7: memref<1xf32, #tpu.memory_space<smem>>, %arg8: memref<32x32xf32, #tpu.memory_space<vmem>>, %arg9: memref<1x32xf32, #tpu.memory_space<vmem>>, %arg10: memref<32x32xf32, #tpu.memory_space<vmem>>, %arg11: memref<1x32xf32, #tpu.memory_space<vmem>>, %arg12: memref<2x16xf32, #tpu.memory_space<vmem>>, %arg13: memref<2x16x32xf32, #tpu.memory_space<vmem>>) attributes {dimension_semantics = [#tpu.dimension_semantics<parallel>], iteration_bounds = array<i64: 1>, scalar_prefetch = 0 : i64, scratch_operands = 0 : i64, tpu.core_type = #tpu.core_type<tc>, window_params = [{pipeline_mode = #tpu.pipeline_mode<synchronous>, transform_indices = @transform_0, window_bounds = array<i64: 2, 32>}, {transform_indices = @transform_1, window_bounds = array<i64: 16, 32>}, {pipeline_mode = #tpu.pipeline_mode<synchronous>, transform_indices = @transform_2, window_bounds = array<i64: 32, 32>}, {pipeline_mode = #tpu.pipeline_mode<synchronous>, transform_indices = @transform_3, window_bounds = array<i64: 32, 32>}, {pipeline_mode = #tpu.pipeline_mode<synchronous>, transform_indices = @transform_4, window_bounds = array<i64: 1, 32>}, {pipeline_mode = #tpu.pipeline_mode<synchronous>, transform_indices = @transform_5, window_bounds = array<i64: 1, 32>}, {transform_indices = @transform_6, window_bounds = array<i64: 1>}, {pipeline_mode = #tpu.pipeline_mode<synchronous>, transform_indices = @transform_7, window_bounds = array<i64: 32, 32>}, {pipeline_mode = #tpu.pipeline_mode<synchronous>, transform_indices = @transform_8, window_bounds = array<i64: 1, 32>}, {pipeline_mode = #tpu.pipeline_mode<synchronous>, transform_indices = @transform_9, window_bounds = array<i64: 32, 32>}, {pipeline_mode = #tpu.pipeline_mode<synchronous>, transform_indices = @transform_10, window_bounds = array<i64: 1, 32>}, {transform_indices = @transform_11, window_bounds = array<i64: 2, 16>}, {transform_indices = @transform_12, window_bounds = array<i64: 2, 16, 32>}]} {
    %c0 = arith.constant 0 : index
    %c0_0 = arith.constant 0 : index
    %0 = vector.load %arg1[%c0, %c0_0] : memref<2x32xf32, #tpu.memory_space<vmem>>, vector<2x32xf32>
    %c0_1 = arith.constant 0 : index
    %c0_2 = arith.constant 0 : index
    %1 = vector.load %arg2[%c0_1, %c0_2] : memref<16x32xf32, #tpu.memory_space<vmem>>, vector<16x32xf32>
    %c0_3 = arith.constant 0 : index
    %c0_4 = arith.constant 0 : index
    %2 = vector.load %arg3[%c0_3, %c0_4] : memref<32x32xf32, #tpu.memory_space<vmem>>, vector<32x32xf32>
    %cst = arith.constant dense<0.000000e+00> : vector<2x32xf32>
    %3 = tpu.matmul %0, %2, %cst {dimension_numbers = #tpu.dot_dimension_numbers<[1], [0], [0], [1], [0, 0, 1, 1], [], []>} : vector<2x32xf32>, vector<32x32xf32>, vector<2x32xf32> -> vector<2x32xf32>
    %c0_5 = arith.constant 0 : index
    %c0_6 = arith.constant 0 : index
    %4 = vector.load %arg4[%c0_5, %c0_6] : memref<32x32xf32, #tpu.memory_space<vmem>>, vector<32x32xf32>
    %cst_7 = arith.constant dense<0.000000e+00> : vector<16x32xf32>
    %5 = tpu.matmul %1, %4, %cst_7 {dimension_numbers = #tpu.dot_dimension_numbers<[1], [0], [0], [1], [0, 0, 1, 1], [], []>} : vector<16x32xf32>, vector<32x32xf32>, vector<16x32xf32> -> vector<16x32xf32>
    %6 = vector.shape_cast %3 : vector<2x32xf32> to vector<2x1x32xf32>
    %7 = vector.shape_cast %5 : vector<16x32xf32> to vector<1x16x32xf32>
    %8 = vector.broadcast %6 : vector<2x1x32xf32> to vector<2x16x32xf32>
    %9 = vector.broadcast %7 : vector<1x16x32xf32> to vector<2x16x32xf32>
    %10 = arith.addf %8, %9 : vector<2x16x32xf32>
    %c0_8 = arith.constant 0 : index
    %c0_9 = arith.constant 0 : index
    %11 = vector.load %arg5[%c0_8, %c0_9] : memref<1x32xf32, #tpu.memory_space<vmem>>, vector<1x32xf32>
    %12 = vector.shape_cast %11 : vector<1x32xf32> to vector<1x1x32xf32>
    %13 = vector.broadcast %12 : vector<1x1x32xf32> to vector<2x16x32xf32>
    %14 = arith.addf %10, %13 : vector<2x16x32xf32>
    %cst_10 = arith.constant 5.000000e-01 : f32
    %15 = vector.broadcast %cst_10 : f32 to vector<2x16x32xf32>
    %16 = arith.mulf %15, %14 : vector<2x16x32xf32>
    %cst_11 = arith.constant 0.707106769 : f32
    %17 = vector.broadcast %cst_11 : f32 to vector<2x16x32xf32>
    %18 = arith.mulf %14, %17 : vector<2x16x32xf32>
    %19 = math.erf %18 : vector<2x16x32xf32>
    %cst_12 = arith.constant 1.000000e+00 : f32
    %20 = vector.broadcast %cst_12 : f32 to vector<2x16x32xf32>
    %21 = arith.addf %20, %19 : vector<2x16x32xf32>
    %22 = arith.mulf %16, %21 : vector<2x16x32xf32>
    %c0_13 = arith.constant 0 : index
    %c0_14 = arith.constant 0 : index
    %23 = vector.load %arg6[%c0_13, %c0_14] : memref<1x32xf32, #tpu.memory_space<vmem>>, vector<1x32xf32>
    %24 = vector.shape_cast %23 : vector<1x32xf32> to vector<1x1x32xf32>
    %25 = vector.broadcast %24 : vector<1x1x32xf32> to vector<2x16x32xf32>
    %26 = arith.mulf %22, %25 : vector<2x16x32xf32>
    %cst_15 = arith.constant dense<0.000000e+00> : vector<2x16xf32>
    %27 = vector.multi_reduction <add>, %26, %cst_15 [2] : vector<2x16x32xf32> to vector<2x16xf32>
    %28 = vector.shape_cast %27 : vector<2x16xf32> to vector<2x16x1xf32>
    %c0_16 = arith.constant 0 : index
    %29 = memref.load %arg7[%c0_16] : memref<1xf32, #tpu.memory_space<smem>>
    %30 = vector.broadcast %29 : f32 to vector<2x16x1xf32>
    %31 = arith.addf %28, %30 : vector<2x16x1xf32>
    %32 = arith.negf %31 : vector<2x16x1xf32>
    %33 = math.exp %32 : vector<2x16x1xf32>
    %cst_17 = arith.constant 1.000000e+00 : f32
    %34 = vector.broadcast %cst_17 : f32 to vector<2x16x1xf32>
    %35 = arith.addf %34, %33 : vector<2x16x1xf32>
    %36 = arith.divf %34, %35 : vector<2x16x1xf32>
    %c0_18 = arith.constant 0 : index
    %c0_19 = arith.constant 0 : index
    %37 = vector.load %arg8[%c0_18, %c0_19] : memref<32x32xf32, #tpu.memory_space<vmem>>, vector<32x32xf32>
    %cst_20 = arith.constant dense<0.000000e+00> : vector<16x32xf32>
    %38 = tpu.matmul %1, %37, %cst_20 {dimension_numbers = #tpu.dot_dimension_numbers<[1], [0], [0], [1], [0, 0, 1, 1], [], []>} : vector<16x32xf32>, vector<32x32xf32>, vector<16x32xf32> -> vector<16x32xf32>
    %39 = vector.shape_cast %38 : vector<16x32xf32> to vector<1x16x32xf32>
    %40 = vector.broadcast %36 : vector<2x16x1xf32> to vector<2x16x32xf32>
    %41 = vector.broadcast %39 : vector<1x16x32xf32> to vector<2x16x32xf32>
    %42 = arith.mulf %40, %41 : vector<2x16x32xf32>
    %c0_21 = arith.constant 0 : index
    %c0_22 = arith.constant 0 : index
    %43 = vector.load %arg9[%c0_21, %c0_22] : memref<1x32xf32, #tpu.memory_space<vmem>>, vector<1x32xf32>
    %44 = vector.shape_cast %43 : vector<1x32xf32> to vector<1x1x32xf32>
    %45 = vector.broadcast %44 : vector<1x1x32xf32> to vector<2x16x32xf32>
    %46 = arith.addf %42, %45 : vector<2x16x32xf32>
    %cst_23 = arith.constant 5.000000e-01 : f32
    %47 = vector.broadcast %cst_23 : f32 to vector<2x16x32xf32>
    %48 = arith.mulf %47, %46 : vector<2x16x32xf32>
    %cst_24 = arith.constant 0.707106769 : f32
    %49 = vector.broadcast %cst_24 : f32 to vector<2x16x32xf32>
    %50 = arith.mulf %46, %49 : vector<2x16x32xf32>
    %51 = math.erf %50 : vector<2x16x32xf32>
    %cst_25 = arith.constant 1.000000e+00 : f32
    %52 = vector.broadcast %cst_25 : f32 to vector<2x16x32xf32>
    %53 = arith.addf %52, %51 : vector<2x16x32xf32>
    %54 = arith.mulf %48, %53 : vector<2x16x32xf32>
    %55 = vector.shape_cast %54 : vector<2x16x32xf32> to vector<32x32xf32>
    %c0_26 = arith.constant 0 : index
    %c0_27 = arith.constant 0 : index
    %56 = vector.load %arg10[%c0_26, %c0_27] : memref<32x32xf32, #tpu.memory_space<vmem>>, vector<32x32xf32>
    %cst_28 = arith.constant dense<0.000000e+00> : vector<32x32xf32>
    %57 = tpu.matmul %55, %56, %cst_28 {dimension_numbers = #tpu.dot_dimension_numbers<[1], [0], [0], [1], [0, 0, 1, 1], [], []>} : vector<32x32xf32>, vector<32x32xf32>, vector<32x32xf32> -> vector<32x32xf32>
    %c0_29 = arith.constant 0 : index
    %c0_30 = arith.constant 0 : index
    %58 = vector.load %arg11[%c0_29, %c0_30] : memref<1x32xf32, #tpu.memory_space<vmem>>, vector<1x32xf32>
    %59 = vector.broadcast %58 : vector<1x32xf32> to vector<32x32xf32>
    %60 = arith.addf %57, %59 : vector<32x32xf32>
    %61 = vector.shape_cast %60 : vector<32x32xf32> to vector<2x16x32xf32>
    %62 = vector.shape_cast %36 : vector<2x16x1xf32> to vector<2x16xf32>
    %c0_31 = arith.constant 0 : index
    %c0_32 = arith.constant 0 : index
    %63 = vector.load %arg12[%c0_31, %c0_32] : memref<2x16xf32, #tpu.memory_space<vmem>>, vector<2x16xf32>
    tpu.vector_store %arg12[%c0_31, %c0_32], %62 {strides = array<i32>} : memref<2x16xf32, #tpu.memory_space<vmem>>, vector<2x16xf32>,
    %c0_33 = arith.constant 0 : index
    %c0_34 = arith.constant 0 : index
    %c0_35 = arith.constant 0 : index
    %64 = vector.load %arg13[%c0_33, %c0_34, %c0_35] : memref<2x16x32xf32, #tpu.memory_space<vmem>>, vector<2x16x32xf32>
    tpu.vector_store %arg13[%c0_33, %c0_34, %c0_35], %61 {strides = array<i32>} : memref<2x16x32xf32, #tpu.memory_space<vmem>>, vector<2x16x32xf32>,
    return
  }
  func.func @transform_0(%arg0: i32) -> (i32, i32) {
    %c0_i32 = arith.constant 0 : i32
    %c0_i32_0 = arith.constant 0 : i32
    %c0_i32_1 = arith.constant 0 : i32
    return %c0_i32, %c0_i32_0 : i32, i32
  }
  func.func @transform_1(%arg0: i32) -> (i32, i32) {
    %c0_i32 = arith.constant 0 : i32
    %c0_i32_0 = arith.constant 0 : i32
    return %arg0, %c0_i32 : i32, i32
  }
  func.func @transform_2(%arg0: i32) -> (i32, i32) {
    %c0_i32 = arith.constant 0 : i32
    %c0_i32_0 = arith.constant 0 : i32
    %c0_i32_1 = arith.constant 0 : i32
    return %c0_i32, %c0_i32_0 : i32, i32
  }
  func.func @transform_3(%arg0: i32) -> (i32, i32) {
    %c0_i32 = arith.constant 0 : i32
    %c0_i32_0 = arith.constant 0 : i32
    %c0_i32_1 = arith.constant 0 : i32
    return %c0_i32, %c0_i32_0 : i32, i32
  }
  func.func @transform_4(%arg0: i32) -> (i32, i32) {
    %c0_i32 = arith.constant 0 : i32
    %c0_i32_0 = arith.constant 0 : i32
    %c0_i32_1 = arith.constant 0 : i32
    return %c0_i32, %c0_i32_0 : i32, i32
  }
  func.func @transform_5(%arg0: i32) -> (i32, i32) {
    %c0_i32 = arith.constant 0 : i32
    %c0_i32_0 = arith.constant 0 : i32
    %c0_i32_1 = arith.constant 0 : i32
    return %c0_i32, %c0_i32_0 : i32, i32
  }
  func.func @transform_6(%arg0: i32) -> i32 {
    %c0_i32 = arith.constant 0 : i32
    %c0_i32_0 = arith.constant 0 : i32
    return %c0_i32 : i32
  }
  func.func @transform_7(%arg0: i32) -> (i32, i32) {
    %c0_i32 = arith.constant 0 : i32
    %c0_i32_0 = arith.constant 0 : i32
    %c0_i32_1 = arith.constant 0 : i32
    return %c0_i32, %c0_i32_0 : i32, i32
  }
  func.func @transform_8(%arg0: i32) -> (i32, i32) {
    %c0_i32 = arith.constant 0 : i32
    %c0_i32_0 = arith.constant 0 : i32
    %c0_i32_1 = arith.constant 0 : i32
    return %c0_i32, %c0_i32_0 : i32, i32
  }
  func.func @transform_9(%arg0: i32) -> (i32, i32) {
    %c0_i32 = arith.constant 0 : i32
    %c0_i32_0 = arith.constant 0 : i32
    %c0_i32_1 = arith.constant 0 : i32
    return %c0_i32, %c0_i32_0 : i32, i32
  }
  func.func @transform_10(%arg0: i32) -> (i32, i32) {
    %c0_i32 = arith.constant 0 : i32
    %c0_i32_0 = arith.constant 0 : i32
    %c0_i32_1 = arith.constant 0 : i32
    return %c0_i32, %c0_i32_0 : i32, i32
  }
  func.func @transform_11(%arg0: i32) -> (i32, i32) {
    %c0_i32 = arith.constant 0 : i32
    %c0_i32_0 = arith.constant 0 : i32
    return %c0_i32, %arg0 : i32, i32
  }
  func.func @transform_12(%arg0: i32) -> (i32, i32, i32) {
    %c0_i32 = arith.constant 0 : i32
    %c0_i32_0 = arith.constant 0 : i32
    %c0_i32_1 = arith.constant 0 : i32
    return %c0_i32, %arg0, %c0_i32_0 : i32, i32, i32
  }
}

</mosaic_0001>

<llo_original>
// kernel: tpu_custom_call.1
$region0: #{tpu_custom_call.1}
  #allocation0 [shape = 'u32[]', space=smem, size = 0x4, offset = 0x4, fixed_abs, tag = 'smem constant byte address 0x4 - core index']
  #allocation1 [shape = 'u32[144,128]{1,0:T(1,128)}', space=vmem, size = 0x12000, scoped, tag = 'internal scratch']
  #allocation2 [shape = 'f32[1]{0:T(128)S(6)}', space=smem, size = 0x200, scoped, tag = 'scoped memory for tpu_custom_call.1']
  %s0 = inlined_call_operand.vmem [shape: f32[2,32], index: 0, kind: input, shape index: {}]
  %s1 = inlined_call_operand.hbm [shape: f32[16,32], index: 1, kind: input, shape index: {}]
  %s2 = inlined_call_operand.hbm [shape: f32[32,32], index: 2, kind: input, shape index: {}]
  %s3 = inlined_call_operand.hbm [shape: f32[32,32], index: 3, kind: input, shape index: {}]
  %s4 = inlined_call_operand.hbm [shape: f32[1,32], index: 4, kind: input, shape index: {}]
  %s5 = inlined_call_operand.hbm [shape: f32[1,32], index: 5, kind: input, shape index: {}]
  %s6 = inlined_call_operand.<no memory space> [shape: f32[1], index: 6, kind: input, shape index: {}]
  %s7 = inlined_call_operand.hbm [shape: f32[32,32], index: 7, kind: input, shape index: {}]
  %s8 = inlined_call_operand.hbm [shape: f32[1,32], index: 8, kind: input, shape index: {}]
  %s9 = inlined_call_operand.vmem [shape: f32[32,32], index: 9, kind: input, shape index: {}]
  %s10 = inlined_call_operand.vmem [shape: f32[1,32], index: 10, kind: input, shape index: {}]
  %s11 = inlined_call_operand.hbm [shape: f32[2,16], index: 11, kind: output, shape index: {0}]
  %s12 = inlined_call_operand.hbm [shape: f32[2,16,32], index: 12, kind: output, shape index: {1}]
  %13 = xla_tuple %s11, %s12
  %s14 = sld [smem:[#allocation0]]
  $region90: #{tpu_custom_call.1} parent=0
    _
  %s16 = ssub.s32 1, %s14
  %s17 = scalar_select 0, %s16, %s14
  %18 = sst [smem:[#allocation2]] %s6
  $region1: #{tpu_custom_call.1} parent=0
    #allocation3 [shape = 'u8[8192]{0}', space=vmem, size = 0x2000, scoped, tag = 'input window, operand 1, single buffered']
    #allocation4 [shape = 's32[1]{0}', space=sflag, size = 0x4, scoped, tag = 'scoped memory for tpu_custom_call.1']
    #allocation5 [shape = 's32[1]{0}', space=sflag, size = 0x4, scoped, tag = 'scoped memory for tpu_custom_call.1']
    #allocation6 [shape = 'u8[16384]{0}', space=vmem, size = 0x4000, scoped, tag = 'input window, operand 2, single buffered']
    #allocation7 [shape = 's32[1]{0}', space=sflag, size = 0x4, scoped, tag = 'scoped memory for tpu_custom_call.1']
    #allocation8 [shape = 'u8[16384]{0}', space=vmem, size = 0x4000, scoped, tag = 'input window, operand 3, single buffered']
    #allocation9 [shape = 'u8[512]{0}', space=vmem, size = 0x400, scoped, tag = 'input window, operand 4, single buffered']
    #allocation10 [shape = 's32[1]{0}', space=sflag, size = 0x4, scoped, tag = 'scoped memory for tpu_custom_call.1']
    #allocation11 [shape = 'u8[512]{0}', space=vmem, size = 0x400, scoped, tag = 'input window, operand 5, single buffered']
    #allocation12 [shape = 'u8[16384]{0}', space=vmem, size = 0x4000, scoped, tag = 'input window, operand 7, single buffered']
    #allocation13 [shape = 's32[1]{0}', space=sflag, size = 0x4, scoped, tag = 'scoped memory for tpu_custom_call.1']
    #allocation14 [shape = 'u8[512]{0}', space=vmem, size = 0x400, scoped, tag = 'input window, operand 8, single buffered']
    #allocation15 [shape = 'u8[1024]{0}', space=vmem, size = 0x400, scoped, tag = 'output window, operand 0, single buffered']
    #allocation16 [shape = 'u8[16384]{0}', space=vmem, size = 0x4000, scoped, tag = 'output window, operand 1, single buffered']
    #allocation17 [shape = 's32[1]{0}', space=sflag, size = 0x4, scoped, tag = 'scoped memory for tpu_custom_call.1']
    %19 = vsyncpa [#allocation4], 0
    %20 = vsyncpa [#allocation7], 0
    %21 = vsyncpa [#allocation10], 0
    %22 = vsyncpa [#allocation13], 0
    %23 = vsyncpa [#allocation5], 0
    %24 = vsyncpa [#allocation17], 0
    // Predicated region
    $region2: #{tpu_custom_call.1} parent=1 // pred_check
      _
    $region3: #{tpu_custom_call.1} parent=1 // pred_check_branch
      %26 = sbr.rel (0) target = $region5
    $region4: #{tpu_custom_call.1} parent=1 // pred_region
      _
    $region5: #{tpu_custom_call.1} parent=1 // pred_fallthru
      _
    // Predicated region
    $region6: #{tpu_custom_call.1} parent=1 // pred_check
      _
    $region7: #{tpu_custom_call.1} parent=1 // pred_check_branch
      %28 = sbr.rel (0) target = $region9
    $region8: #{tpu_custom_call.1} parent=1 // pred_region
      %s30 = ssub.s32 256, 256
      %31 = vsyncadd [#allocation4], %s30
      %s32 = sshll.u32 [#allocation3], 4
      %s33 = int_to_ptr.vmem [resolvable:$true] %s32
      %38 = dma.hbm_to_vmem [thread:$0]  %s1, 256, %s33, [#allocation4], 128, 128, 8
    $region9: #{tpu_custom_call.1} parent=1 // pred_fallthru
      _
    // Predicated region
    $region10: #{tpu_custom_call.1} parent=1 // pred_check
      _
    $region11: #{tpu_custom_call.1} parent=1 // pred_check_branch
      %40 = sbr.rel (0) target = $region13
    $region12: #{tpu_custom_call.1} parent=1 // pred_region
      %s42 = ssub.s32 512, 512
      %43 = vsyncadd [#allocation7], %s42
      %s44 = sshll.u32 [#allocation6], 4
      %s45 = int_to_ptr.vmem [resolvable:$true] %s44
      %50 = dma.hbm_to_vmem [thread:$0]  %s2, 512, %s45, [#allocation7], 128, 128, 8
    $region13: #{tpu_custom_call.1} parent=1 // pred_fallthru
      _
    // Predicated region
    $region14: #{tpu_custom_call.1} parent=1 // pred_check
      _
    $region15: #{tpu_custom_call.1} parent=1 // pred_check_branch
      %52 = sbr.rel (0) target = $region17
    $region16: #{tpu_custom_call.1} parent=1 // pred_region
      %s54 = ssub.s32 512, 512
      %55 = vsyncadd [#allocation7], %s54
      %s56 = sshll.u32 [#allocation8], 4
      %s57 = int_to_ptr.vmem [resolvable:$true] %s56
      %62 = dma.hbm_to_vmem [thread:$0]  %s3, 512, %s57, [#allocation7], 128, 128, 8
    $region17: #{tpu_custom_call.1} parent=1 // pred_fallthru
      _
    // Predicated region
    $region18: #{tpu_custom_call.1} parent=1 // pred_check
      _
    $region19: #{tpu_custom_call.1} parent=1 // pred_check_branch
      %64 = sbr.rel (0) target = $region21
    $region20: #{tpu_custom_call.1} parent=1 // pred_region
      %s66 = ssub.s32 16, 16
      %67 = vsyncadd [#allocation10], %s66
      %s69 = sshll.u32 [#allocation9], 4
      %s70 = int_to_ptr.vmem [resolvable:$true] %s69
      %72 = dma.hbm_to_vmem [thread:$0]  %s4, 16, %s70, [#allocation10]
    $region21: #{tpu_custom_call.1} parent=1 // pred_fallthru
      _
    // Predicated region
    $region22: #{tpu_custom_call.1} parent=1 // pred_check
      _
    $region23: #{tpu_custom_call.1} parent=1 // pred_check_branch
      %74 = sbr.rel (0) target = $region25
    $region24: #{tpu_custom_call.1} parent=1 // pred_region
      %s76 = ssub.s32 16, 16
      %77 = vsyncadd [#allocation10], %s76
      %s79 = sshll.u32 [#allocation11], 4
      %s80 = int_to_ptr.vmem [resolvable:$true] %s79
      %82 = dma.hbm_to_vmem [thread:$0]  %s5, 16, %s80, [#allocation10]
    $region25: #{tpu_custom_call.1} parent=1 // pred_fallthru
      _
    // Predicated region
    $region26: #{tpu_custom_call.1} parent=1 // pred_check
      _
    $region27: #{tpu_custom_call.1} parent=1 // pred_check_branch
      %84 = sbr.rel (0) target = $region29
    $region28: #{tpu_custom_call.1} parent=1 // pred_region
      _
    $region29: #{tpu_custom_call.1} parent=1 // pred_fallthru
      _
    // Predicated region
    $region30: #{tpu_custom_call.1} parent=1 // pred_check
      _
    $region31: #{tpu_custom_call.1} parent=1 // pred_check_branch
      %86 = sbr.rel (0) target = $region33
    $region32: #{tpu_custom_call.1} parent=1 // pred_region
      %s88 = ssub.s32 512, 512
      %89 = vsyncadd [#allocation13], %s88
      %s90 = sshll.u32 [#allocation12], 4
      %s91 = int_to_ptr.vmem [resolvable:$true] %s90
      %96 = dma.hbm_to_vmem [thread:$0]  %s7, 512, %s91, [#allocation13], 128, 128, 8
    $region33: #{tpu_custom_call.1} parent=1 // pred_fallthru
      _
    // Predicated region
    $region34: #{tpu_custom_call.1} parent=1 // pred_check
      _
    $region35: #{tpu_custom_call.1} parent=1 // pred_check_branch
      %98 = sbr.rel (0) target = $region37
    $region36: #{tpu_custom_call.1} parent=1 // pred_region
      %s100 = ssub.s32 16, 16
      %101 = vsyncadd [#allocation13], %s100
      %s103 = sshll.u32 [#allocation14], 4
      %s104 = int_to_ptr.vmem [resolvable:$true] %s103
      %106 = dma.hbm_to_vmem [thread:$0]  %s8, 16, %s104, [#allocation13]
    $region37: #{tpu_custom_call.1} parent=1 // pred_fallthru
      _
    // Predicated region
    $region38: #{tpu_custom_call.1} parent=1 // pred_check
      _
    $region39: #{tpu_custom_call.1} parent=1 // pred_check_branch
      %108 = sbr.rel (0) target = $region41
    $region40: #{tpu_custom_call.1} parent=1 // pred_region
      _
    $region41: #{tpu_custom_call.1} parent=1 // pred_fallthru
      _
    // Predicated region
    $region42: #{tpu_custom_call.1} parent=1 // pred_check
      _
    $region43: #{tpu_custom_call.1} parent=1 // pred_check_branch
      %110 = sbr.rel (0) target = $region45
    $region44: #{tpu_custom_call.1} parent=1 // pred_region
      _
    $region45: #{tpu_custom_call.1} parent=1 // pred_fallthru
      _
    // Predicated region
    $region46: #{tpu_custom_call.1} parent=1 // pred_check
      _
    $region47: #{tpu_custom_call.1} parent=1 // pred_check_branch
      %112 = sbr.rel (0) target = $region49
    $region48: #{tpu_custom_call.1} parent=1 // pred_region
      %113 = dma.done [#allocation4], 256
    $region49: #{tpu_custom_call.1} parent=1 // pred_fallthru
      _
    // Predicated region
    $region50: #{tpu_custom_call.1} parent=1 // pred_check
      _
    $region51: #{tpu_custom_call.1} parent=1 // pred_check_branch
      %115 = sbr.rel (0) target = $region53
    $region52: #{tpu_custom_call.1} parent=1 // pred_region
      %116 = dma.done [#allocation7], 512
    $region53: #{tpu_custom_call.1} parent=1 // pred_fallthru
      _
    // Predicated region
    $region54: #{tpu_custom_call.1} parent=1 // pred_check
      _
    $region55: #{tpu_custom_call.1} parent=1 // pred_check_branch
      %118 = sbr.rel (0) target = $region57
    $region56: #{tpu_custom_call.1} parent=1 // pred_region
      %119 = dma.done [#allocation7], 512
    $region57: #{tpu_custom_call.1} parent=1 // pred_fallthru
      _
    // Predicated region
    $region58: #{tpu_custom_call.1} parent=1 // pred_check
      _
    $region59: #{tpu_custom_call.1} parent=1 // pred_check_branch
      %121 = sbr.rel (0) target = $region61
    $region60: #{tpu_custom_call.1} parent=1 // pred_region
      %122 = dma.done [#allocation10], 16
    $region61: #{tpu_custom_call.1} parent=1 // pred_fallthru
      _
    // Predicated region
    $region62: #{tpu_custom_call.1} parent=1 // pred_check
      _
    $region63: #{tpu_custom_call.1} parent=1 // pred_check_branch
      %124 = sbr.rel (0) target = $region65
    $region64: #{tpu_custom_call.1} parent=1 // pred_region
      %125 = dma.done [#allocation10], 16
    $region65: #{tpu_custom_call.1} parent=1 // pred_fallthru
      _
    // Predicated region
    $region66: #{tpu_custom_call.1} parent=1 // pred_check
      _
    $region67: #{tpu_custom_call.1} parent=1 // pred_check_branch
      %127 = sbr.rel (0) target = $region69
    $region68: #{tpu_custom_call.1} parent=1 // pred_region
      %128 = dma.done [#allocation13], 512
    $region69: #{tpu_custom_call.1} parent=1 // pred_fallthru
      _
    // Predicated region
    $region70: #{tpu_custom_call.1} parent=1 // pred_check
      _
    $region71: #{tpu_custom_call.1} parent=1 // pred_check_branch
      %130 = sbr.rel (0) target = $region73
    $region72: #{tpu_custom_call.1} parent=1 // pred_region
      %131 = dma.done [#allocation13], 16
    $region73: #{tpu_custom_call.1} parent=1 // pred_fallthru
      _
    %v132 = vld [vmem:[%s0] sm:$0x3]
    %v133 = vld [vmem:[#allocation3] sm:$0xff]
    %v134 = vld [vmem:[#allocation3 + $0x8] sm:$0xff]
    %v135 = vld [vmem:[#allocation6] sm:$0xff]
    %v136 = vld [vmem:[#allocation6 + $0x8] sm:$0xff]
    %v137 = vld [vmem:[#allocation6 + $0x10] sm:$0xff]
    %v138 = vld [vmem:[#allocation6 + $0x18] sm:$0xff]
    %vm139 = vcmask 261120
    %v141 = vsel %vm139, %v132, 0
    %143 = vmatprep.subr.mxu0 0.0
    %144 = vmatpush1.msra.mxu0 %v135
    %145 = vmatprep.subr.mxu0 0.0
    %146 = vmatpush1.msra.mxu0 %v136
    %147 = vmatprep.subr.mxu0 0.0
    %148 = vmatpush1.msra.mxu0 %v137
    %149 = vmatprep.subr.mxu0 0.0
    %150 = vmatpush1.msra.mxu0 %v138
    %151 = vmatprep.subr.mxu0 0.0
    %152 = vmatpush1.msra.mxu0 0.0
    %153 = vmatprep.subr.mxu0 0.0
    %154 = vmatpush1.msra.mxu0 0.0
    %155 = vmatprep.subr.mxu0 0.0
    %156 = vmatpush1.msra.mxu0 0.0
    %157 = vmatprep.subr.mxu0 0.0
    %158 = vmatpush1.msra.mxu0 0.0
    %159 = vmatprep.subr.mxu0 0.0
    %160 = vmatpush1.msra.mxu0 0.0
    %161 = vmatprep.subr.mxu0 0.0
    %162 = vmatpush1.msra.mxu0 0.0
    %163 = vmatprep.subr.mxu0 0.0
    %164 = vmatpush1.msra.mxu0 0.0
    %165 = vmatprep.subr.mxu0 0.0
    %166 = vmatpush1.msra.mxu0 0.0
    %167 = vmatprep.subr.mxu0 0.0
    %168 = vmatpush1.msra.mxu0 0.0
    %169 = vmatprep.subr.mxu0 0.0
    %170 = vmatpush1.msra.mxu0 0.0
    %171 = vmatprep.subr.mxu0 0.0
    %172 = vmatpush1.msra.mxu0 0.0
    %173 = vmatprep.subr.mxu0 0.0
    %174 = vmatpush1.msra.mxu0 0.0
    %175 = vmatprep.subr.mxu0 0.0
    %176 = vmatpush1.msra.mxu0 0.0
    %177 = vmatprep.subr.mxu0 0.0
    %178 = vmatpush1.msra.mxu0 0.0
    %179 = vmatprep.subr.mxu0 0.0
    %180 = vmatpush1.msra.mxu0 0.0
    %181 = vmatprep.subr.mxu0 0.0
    %182 = vmatpush1.msra.mxu0 0.0
    %183 = vmatprep.subr.mxu0 0.0
    %184 = vmatpush1.msra.mxu0 0.0
    %185 = vmatprep.subr.mxu0 0.0
    %186 = vmatpush1.msra.mxu0 0.0
    %187 = vmatprep.subr.mxu0 0.0
    %188 = vmatpush1.msra.mxu0 0.0
    %189 = vmatprep.subr.mxu0 0.0
    %190 = vmatpush1.msra.mxu0 0.0
    %191 = vmatprep.subr.mxu0 0.0
    %192 = vmatpush1.msra.mxu0 0.0
    %193 = vmatprep.subr.mxu0 0.0
    %194 = vmatpush1.msra.mxu0 0.0
    %195 = vmatprep.subr.mxu0 0.0
    %196 = vmatpush1.msra.mxu0 0.0
    %197 = vmatprep.subr.mxu0 0.0
    %198 = vmatpush1.msra.mxu0 0.0
    %199 = vmatprep.subr.mxu0 0.0
    %200 = vmatpush1.msra.mxu0 0.0
    %201 = vmatprep.subr.mxu0 0.0
    %202 = vmatpush1.msra.mxu0 0.0
    %203 = vmatprep.subr.mxu0 0.0
    %204 = vmatpush1.msra.mxu0 0.0
    %205 = vmatprep.subr.mxu0 0.0
    %206 = vmatpush1.msra.mxu0 0.0
    %207 = vmatprep.mubr.f32.mxu0 0.0
    %208 = vmatmul.mubr.f32.gmra.mrb[0].mxu0 %v141
    %v209 = vpop.f32.mrb[0].mxu0
    %v210 = vadd.f32 0.0, %v209
    %v211 = vpop.f32.mrb[0].mxu0
    %212 = vdwg.mxu0
    %v213 = vld [vmem:[#allocation8] sm:$0xff]
    %v214 = vld [vmem:[#allocation8 + $0x8] sm:$0xff]
    %v215 = vld [vmem:[#allocation8 + $0x10] sm:$0xff]
    %v216 = vld [vmem:[#allocation8 + $0x18] sm:$0xff]
    %v218 = vsel %vm139, %v133, 0
    %v221 = vsel %vm139, %v134, 0
    %223 = vmatprep.subr.mxu0 0.0
    %224 = vmatpush1.msra.mxu0 %v213
    %225 = vmatprep.subr.mxu0 0.0
    %226 = vmatpush1.msra.mxu0 %v214
    %227 = vmatprep.subr.mxu0 0.0
    %228 = vmatpush1.msra.mxu0 %v215
    %229 = vmatprep.subr.mxu0 0.0
    %230 = vmatpush1.msra.mxu0 %v216
    %231 = vmatprep.subr.mxu0 0.0
    %232 = vmatpush1.msra.mxu0 0.0
    %233 = vmatprep.subr.mxu0 0.0
    %234 = vmatpush1.msra.mxu0 0.0
    %235 = vmatprep.subr.mxu0 0.0
    %236 = vmatpush1.msra.mxu0 0.0
    %237 = vmatprep.subr.mxu0 0.0
    %238 = vmatpush1.msra.mxu0 0.0
    %239 = vmatprep.subr.mxu0 0.0
    %240 = vmatpush1.msra.mxu0 0.0
    %241 = vmatprep.subr.mxu0 0.0
    %242 = vmatpush1.msra.mxu0 0.0
    %243 = vmatprep.subr.mxu0 0.0
    %244 = vmatpush1.msra.mxu0 0.0
    %245 = vmatprep.subr.mxu0 0.0
    %246 = vmatpush1.msra.mxu0 0.0
    %247 = vmatprep.subr.mxu0 0.0
    %248 = vmatpush1.msra.mxu0 0.0
    %249 = vmatprep.subr.mxu0 0.0
    %250 = vmatpush1.msra.mxu0 0.0
    %251 = vmatprep.subr.mxu0 0.0
    %252 = vmatpush1.msra.mxu0 0.0
    %253 = vmatprep.subr.mxu0 0.0
    %254 = vmatpush1.msra.mxu0 0.0
    %255 = vmatprep.subr.mxu0 0.0
    %256 = vmatpush1.msra.mxu0 0.0
    %257 = vmatprep.subr.mxu0 0.0
    %258 = vmatpush1.msra.mxu0 0.0
    %259 = vmatprep.subr.mxu0 0.0
    %260 = vmatpush1.msra.mxu0 0.0
    %261 = vmatprep.subr.mxu0 0.0
    %262 = vmatpush1.msra.mxu0 0.0
    %263 = vmatprep.subr.mxu0 0.0
    %264 = vmatpush1.msra.mxu0 0.0
    %265 = vmatprep.subr.mxu0 0.0
    %266 = vmatpush1.msra.mxu0 0.0
    %267 = vmatprep.subr.mxu0 0.0
    %268 = vmatpush1.msra.mxu0 0.0
    %269 = vmatprep.subr.mxu0 0.0
    %270 = vmatpush1.msra.mxu0 0.0
    %271 = vmatprep.subr.mxu0 0.0
    %272 = vmatpush1.msra.mxu0 0.0
    %273 = vmatprep.subr.mxu0 0.0
    %274 = vmatpush1.msra.mxu0 0.0
    %275 = vmatprep.subr.mxu0 0.0
    %276 = vmatpush1.msra.mxu0 0.0
    %277 = vmatprep.subr.mxu0 0.0
    %278 = vmatpush1.msra.mxu0 0.0
    %279 = vmatprep.subr.mxu0 0.0
    %280 = vmatpush1.msra.mxu0 0.0
    %281 = vmatprep.subr.mxu0 0.0
    %282 = vmatpush1.msra.mxu0 0.0
    %283 = vmatprep.subr.mxu0 0.0
    %284 = vmatpush1.msra.mxu0 0.0
    %285 = vmatprep.subr.mxu0 0.0
    %286 = vmatpush1.msra.mxu0 0.0
    %287 = vmatprep.mubr.f32.mxu0 0.0
    %288 = vmatmul.mubr.f32.gmra.mrb[0].mxu0 %v218
    %v289 = vpop.f32.mrb[0].mxu0
    %v290 = vadd.f32 0.0, %v289
    %v291 = vpop.f32.mrb[0].mxu0
    %292 = vmatprep.mubr.f32.mxu0 0.0
    %293 = vmatmul.mubr.f32.gmra.mrb[0].mxu0 %v221
    %v294 = vpop.f32.mrb[0].mxu0
    %v295 = vadd.f32 0.0, %v294
    %v296 = vpop.f32.mrb[0].mxu0
    %297 = vdwg.mxu0
    %v300 = vunpack.c.l.s4 1966171168
    %v301 = vunpack.c.0.s8 %v300
    %v302 = vlaneseq
    %v303 = vshrl.u32 %v302, 7
    %v304 = vsub.s32 %v301, %v303
    %v305 = vrot.slane %v210, %v304
    %v306 = vcombine.high %v305, %v305
    %v308 = vunpack.c.l.s4 1966171168
    %v309 = vunpack.c.0.s8 %v308
    %v310 = vlaneseq
    %v311 = vshrl.u32 %v310, 7
    %v312 = vsub.s32 %v309, %v311
    %v313 = vrot.slane %v305, %v312
    %v315 = vunpack.c.l.s4 1966171168
    %v316 = vunpack.c.0.s8 %v315
    %v317 = vlaneseq
    %v318 = vshrl.u32 %v317, 7
    %v319 = vsub.s32 %v316, %v318
    %v320 = vrot.slane %v306, %v319
    %v321 = vlaneseq
    %v322 = vshrl.u32 %v321, 7
    %v323 = vsub.s32 0, %v322
    %v324 = vrot.slane %v313, %v323
    %v325 = vlaneseq
    %v326 = vshrl.u32 %v325, 7
    %v327 = vsub.s32 0, %v326
    %v328 = vrot.slane %v320, %v327
    %v331 = vadd.f32 %v324, %v290
    %v332 = vadd.f32 %v324, %v295
    %v333 = vadd.f32 %v328, %v290
    %v334 = vadd.f32 %v328, %v295
    %v335 = vld [vmem:[#allocation9] sm:$0x1]
    %v337 = vlaneseq
    %v338 = vshrl.u32 %v337, 7
    %v339 = vsub.s32 0, %v338
    %v340 = vrot.slane %v335, %v339
    %v342 = vadd.f32 %v331, %v340
    %v343 = vadd.f32 %v332, %v340
    %v344 = vadd.f32 %v333, %v340
    %v345 = vadd.f32 %v334, %v340
    %v346 = vmul.f32 %v342, 0.5
    %v347 = vmul.f32 %v343, 0.5
    %v348 = vmul.f32 %v344, 0.5
    %v349 = vmul.f32 %v345, 0.5
    %v350 = vmul.f32 %v342, 0.70710677
    %v351 = vmul.f32 %v343, 0.70710677
    %v352 = vmul.f32 %v344, 0.70710677
    %v353 = vmul.f32 %v345, 0.70710677
    %v354 = verf.f32.pop %v350
    %v355 = verf.f32.pop %v351
    %v356 = verf.f32.pop %v352
    %v357 = verf.f32.pop %v353
    %v358 = vadd.f32 %v354, 1.0
    %v359 = vadd.f32 %v355, 1.0
    %v360 = vadd.f32 %v356, 1.0
    %v361 = vadd.f32 %v357, 1.0
    %v362 = vmul.f32 %v346, %v358
    %v363 = vmul.f32 %v347, %v359
    %v364 = vmul.f32 %v348, %v360
    %v365 = vmul.f32 %v349, %v361
    %v366 = vld [vmem:[#allocation11] sm:$0x1]
    %v368 = vlaneseq
    %v369 = vshrl.u32 %v368, 7
    %v370 = vsub.s32 0, %v369
    %v371 = vrot.slane %v366, %v370
    %v373 = vmul.f32 %v362, %v371
    %v374 = vmul.f32 %v363, %v371
    %v375 = vmul.f32 %v364, %v371
    %v376 = vmul.f32 %v365, %v371
    %v377 = vsel %vm139, %v373, 0.0
    %378 = vadd.xlane.f32.xlu0 %v377
    %v379 = vpop.xlane.xlu0 %378
    %v380 = vsel %vm139, %v374, 0.0
    %381 = vadd.xlane.f32.xlu0 %v380
    %v382 = vpop.xlane.xlu0 %381
    %v383 = vsel %vm139, %v375, 0.0
    %384 = vadd.xlane.f32.xlu0 %v383
    %v385 = vpop.xlane.xlu0 %384
    %v386 = vsel %vm139, %v376, 0.0
    %387 = vadd.xlane.f32.xlu0 %v386
    %v388 = vpop.xlane.xlu0 %387
    %s389 = sld [smem:[#allocation2]]
    %v390 = vstv %s389
    %v391 = vadd.f32 %v379, %v390
    %v392 = vadd.f32 %v382, %v390
    %v393 = vadd.f32 %v385, %v390
    %v394 = vadd.f32 %v388, %v390
    %v395 = vxor.u32 %v391, 2147483648
    %v396 = vxor.u32 %v392, 2147483648
    %v397 = vxor.u32 %v393, 2147483648
    %v398 = vxor.u32 %v394, 2147483648
    %v399 = vmul.f32 %v395, 1.442695
    %v400 = vpow.pop %v399
    %v401 = vmul.f32 %v396, 1.442695
    %v402 = vpow.pop %v401
    %v403 = vmul.f32 %v397, 1.442695
    %v404 = vpow.pop %v403
    %v405 = vmul.f32 %v398, 1.442695
    %v406 = vpow.pop %v405
    %v407 = vadd.f32 %v400, 1.0
    %v408 = vadd.f32 %v402, 1.0
    %v409 = vadd.f32 %v404, 1.0
    %v410 = vadd.f32 %v406, 1.0
    %v411 = vrcp.pop %v407
    %v412 = vmul.f32 1.0, %v411
    %v413 = vrcp.pop %v408
    %v414 = vmul.f32 1.0, %v413
    %v415 = vrcp.pop %v409
    %v416 = vmul.f32 1.0, %v415
    %v417 = vrcp.pop %v410
    %v418 = vmul.f32 1.0, %v417
    %v419 = vld [vmem:[#allocation12] sm:$0xff]
    %v420 = vld [vmem:[#allocation12 + $0x8] sm:$0xff]
    %v421 = vld [vmem:[#allocation12 + $0x10] sm:$0xff]
    %v422 = vld [vmem:[#allocation12 + $0x18] sm:$0xff]
    %423 = vmatprep.subr.mxu0 0.0
    %424 = vmatpush1.msra.mxu0 %v419
    %425 = vmatprep.subr.mxu0 0.0
    %426 = vmatpush1.msra.mxu0 %v420
    %427 = vmatprep.subr.mxu0 0.0
    %428 = vmatpush1.msra.mxu0 %v421
    %429 = vmatprep.subr.mxu0 0.0
    %430 = vmatpush1.msra.mxu0 %v422
    %431 = vmatprep.subr.mxu0 0.0
    %432 = vmatpush1.msra.mxu0 0.0
    %433 = vmatprep.subr.mxu0 0.0
    %434 = vmatpush1.msra.mxu0 0.0
    %435 = vmatprep.subr.mxu0 0.0
    %436 = vmatpush1.msra.mxu0 0.0
    %437 = vmatprep.subr.mxu0 0.0
    %438 = vmatpush1.msra.mxu0 0.0
    %439 = vmatprep.subr.mxu0 0.0
    %440 = vmatpush1.msra.mxu0 0.0
    %441 = vmatprep.subr.mxu0 0.0
    %442 = vmatpush1.msra.mxu0 0.0
    %443 = vmatprep.subr.mxu0 0.0
    %444 = vmatpush1.msra.mxu0 0.0
    %445 = vmatprep.subr.mxu0 0.0
    %446 = vmatpush1.msra.mxu0 0.0
    %447 = vmatprep.subr.mxu0 0.0
    %448 = vmatpush1.msra.mxu0 0.0
    %449 = vmatprep.subr.mxu0 0.0
    %450 = vmatpush1.msra.mxu0 0.0
    %451 = vmatprep.subr.mxu0 0.0
    %452 = vmatpush1.msra.mxu0 0.0
    %453 = vmatprep.subr.mxu0 0.0
    %454 = vmatpush1.msra.mxu0 0.0
    %455 = vmatprep.subr.mxu0 0.0
    %456 = vmatpush1.msra.mxu0 0.0
    %457 = vmatprep.subr.mxu0 0.0
    %458 = vmatpush1.msra.mxu0 0.0
    %459 = vmatprep.subr.mxu0 0.0
    %460 = vmatpush1.msra.mxu0 0.0
    %461 = vmatprep.subr.mxu0 0.0
    %462 = vmatpush1.msra.mxu0 0.0
    %463 = vmatprep.subr.mxu0 0.0
    %464 = vmatpush1.msra.mxu0 0.0
    %465 = vmatprep.subr.mxu0 0.0
    %466 = vmatpush1.msra.mxu0 0.0
    %467 = vmatprep.subr.mxu0 0.0
    %468 = vmatpush1.msra.mxu0 0.0
    %469 = vmatprep.subr.mxu0 0.0
    %470 = vmatpush1.msra.mxu0 0.0
    %471 = vmatprep.subr.mxu0 0.0
    %472 = vmatpush1.msra.mxu0 0.0
    %473 = vmatprep.subr.mxu0 0.0
    %474 = vmatpush1.msra.mxu0 0.0
    %475 = vmatprep.subr.mxu0 0.0
    %476 = vmatpush1.msra.mxu0 0.0
    %477 = vmatprep.subr.mxu0 0.0
    %478 = vmatpush1.msra.mxu0 0.0
    %479 = vmatprep.subr.mxu0 0.0
    %480 = vmatpush1.msra.mxu0 0.0
    %481 = vmatprep.subr.mxu0 0.0
    %482 = vmatpush1.msra.mxu0 0.0
    %483 = vmatprep.subr.mxu0 0.0
    %484 = vmatpush1.msra.mxu0 0.0
    %485 = vmatprep.subr.mxu0 0.0
    %486 = vmatpush1.msra.mxu0 0.0
    %487 = vmatprep.mubr.f32.mxu0 0.0
    %488 = vmatmul.mubr.f32.gmra.mrb[0].mxu0 %v218
    %v489 = vpop.f32.mrb[0].mxu0
    %v490 = vadd.f32 0.0, %v489
    %v491 = vpop.f32.mrb[0].mxu0
    %492 = vmatprep.mubr.f32.mxu0 0.0
    %493 = vmatmul.mubr.f32.gmra.mrb[0].mxu0 %v221
    %v494 = vpop.f32.mrb[0].mxu0
    %v495 = vadd.f32 0.0, %v494
    %v496 = vpop.f32.mrb[0].mxu0
    %497 = vdwg.mxu0
    %v498 = vmul.f32 %v412, %v490
    %v499 = vmul.f32 %v414, %v495
    %v500 = vmul.f32 %v416, %v490
    %v501 = vmul.f32 %v418, %v495
    %v502 = vld [vmem:[#allocation14] sm:$0x1]
    %v504 = vlaneseq
    %v505 = vshrl.u32 %v504, 7
    %v506 = vsub.s32 0, %v505
    %v507 = vrot.slane %v502, %v506
    %v509 = vadd.f32 %v498, %v507
    %v510 = vadd.f32 %v499, %v507
    %v511 = vadd.f32 %v500, %v507
    %v512 = vadd.f32 %v501, %v507
    %v513 = vmul.f32 %v509, 0.5
    %v514 = vmul.f32 %v510, 0.5
    %v515 = vmul.f32 %v511, 0.5
    %v516 = vmul.f32 %v512, 0.5
    %v517 = vmul.f32 %v509, 0.70710677
    %v518 = vmul.f32 %v510, 0.70710677
    %v519 = vmul.f32 %v511, 0.70710677
    %v520 = vmul.f32 %v512, 0.70710677
    %v521 = verf.f32.pop %v517
    %v522 = verf.f32.pop %v518
    %v523 = verf.f32.pop %v519
    %v524 = verf.f32.pop %v520
    %v525 = vadd.f32 %v521, 1.0
    %v526 = vadd.f32 %v522, 1.0
    %v527 = vadd.f32 %v523, 1.0
    %v528 = vadd.f32 %v524, 1.0
    %v529 = vmul.f32 %v513, %v525
    %v530 = vmul.f32 %v514, %v526
    %v531 = vmul.f32 %v515, %v527
    %v532 = vmul.f32 %v516, %v528
    %v533 = vld [vmem:[%s9] sm:$0xff]
    %v534 = vld [vmem:[%s9 + $0x8] sm:$0xff]
    %v535 = vld [vmem:[%s9 + $0x10] sm:$0xff]
    %v536 = vld [vmem:[%s9 + $0x18] sm:$0xff]
    %v537 = vld [vmem:[%s10] sm:$0x1]
    %v539 = vlaneseq
    %v540 = vshrl.u32 %v539, 7
    %v541 = vsub.s32 0, %v540
    %v542 = vrot.slane %v537, %v541
    %v545 = vsel %vm139, %v529, 0
    %v548 = vsel %vm139, %v530, 0
    %v551 = vsel %vm139, %v531, 0
    %v554 = vsel %vm139, %v532, 0
    %556 = vmatprep.subr.mxu0 0.0
    %557 = vmatpush1.msra.mxu0 %v533
    %558 = vmatprep.subr.mxu0 0.0
    %559 = vmatpush1.msra.mxu0 %v534
    %560 = vmatprep.subr.mxu0 0.0
    %561 = vmatpush1.msra.mxu0 %v535
    %562 = vmatprep.subr.mxu0 0.0
    %563 = vmatpush1.msra.mxu0 %v536
    %564 = vmatprep.subr.mxu0 0.0
    %565 = vmatpush1.msra.mxu0 0.0
    %566 = vmatprep.subr.mxu0 0.0
    %567 = vmatpush1.msra.mxu0 0.0
    %568 = vmatprep.subr.mxu0 0.0
    %569 = vmatpush1.msra.mxu0 0.0
    %570 = vmatprep.subr.mxu0 0.0
    %571 = vmatpush1.msra.mxu0 0.0
    %572 = vmatprep.subr.mxu0 0.0
    %573 = vmatpush1.msra.mxu0 0.0
    %574 = vmatprep.subr.mxu0 0.0
    %575 = vmatpush1.msra.mxu0 0.0
    %576 = vmatprep.subr.mxu0 0.0
    %577 = vmatpush1.msra.mxu0 0.0
    %578 = vmatprep.subr.mxu0 0.0
    %579 = vmatpush1.msra.mxu0 0.0
    %580 = vmatprep.subr.mxu0 0.0
    %581 = vmatpush1.msra.mxu0 0.0
    %582 = vmatprep.subr.mxu0 0.0
    %583 = vmatpush1.msra.mxu0 0.0
    %584 = vmatprep.subr.mxu0 0.0
    %585 = vmatpush1.msra.mxu0 0.0
    %586 = vmatprep.subr.mxu0 0.0
    %587 = vmatpush1.msra.mxu0 0.0
    %588 = vmatprep.subr.mxu0 0.0
    %589 = vmatpush1.msra.mxu0 0.0
    %590 = vmatprep.subr.mxu0 0.0
    %591 = vmatpush1.msra.mxu0 0.0
    %592 = vmatprep.subr.mxu0 0.0
    %593 = vmatpush1.msra.mxu0 0.0
    %594 = vmatprep.subr.mxu0 0.0
    %595 = vmatpush1.msra.mxu0 0.0
    %596 = vmatprep.subr.mxu0 0.0
    %597 = vmatpush1.msra.mxu0 0.0
    %598 = vmatprep.subr.mxu0 0.0
    %599 = vmatpush1.msra.mxu0 0.0
    %600 = vmatprep.subr.mxu0 0.0
    %601 = vmatpush1.msra.mxu0 0.0
    %602 = vmatprep.subr.mxu0 0.0
    %603 = vmatpush1.msra.mxu0 0.0
    %604 = vmatprep.subr.mxu0 0.0
    %605 = vmatpush1.msra.mxu0 0.0
    %606 = vmatprep.subr.mxu0 0.0
    %607 = vmatpush1.msra.mxu0 0.0
    %608 = vmatprep.subr.mxu0 0.0
    %609 = vmatpush1.msra.mxu0 0.0
    %610 = vmatprep.subr.mxu0 0.0
    %611 = vmatpush1.msra.mxu0 0.0
    %612 = vmatprep.subr.mxu0 0.0
    %613 = vmatpush1.msra.mxu0 0.0
    %614 = vmatprep.subr.mxu0 0.0
    %615 = vmatpush1.msra.mxu0 0.0
    %616 = vmatprep.subr.mxu0 0.0
    %617 = vmatpush1.msra.mxu0 0.0
    %618 = vmatprep.subr.mxu0 0.0
    %619 = vmatpush1.msra.mxu0 0.0
    %620 = vmatprep.mubr.f32.mxu0 0.0
    %621 = vmatmul.mubr.f32.gmra.mrb[0].mxu0 %v545
    %v622 = vpop.f32.mrb[0].mxu0
    %v623 = vadd.f32 %v542, %v622
    %v624 = vpop.f32.mrb[0].mxu0
    %625 = vmatprep.mubr.f32.mxu0 0.0
    %626 = vmatmul.mubr.f32.gmra.mrb[0].mxu0 %v548
    %v627 = vpop.f32.mrb[0].mxu0
    %v628 = vadd.f32 %v542, %v627
    %v629 = vpop.f32.mrb[0].mxu0
    %630 = vmatprep.mubr.f32.mxu0 0.0
    %631 = vmatmul.mubr.f32.gmra.mrb[0].mxu0 %v551
    %v632 = vpop.f32.mrb[0].mxu0
    %v633 = vadd.f32 %v542, %v632
    %v634 = vpop.f32.mrb[0].mxu0
    %635 = vmatprep.mubr.f32.mxu0 0.0
    %636 = vmatmul.mubr.f32.gmra.mrb[0].mxu0 %v554
    %v637 = vpop.f32.mrb[0].mxu0
    %v638 = vadd.f32 %v542, %v637
    %v639 = vpop.f32.mrb[0].mxu0
    %640 = vdwg.mxu0
    %v645 = vlaneseq
    %v646 = vand.u32 %v645, 127
    %v647 = vlaneseq
    %v648 = vshrl.u32 %v647, 7
    %v649 = vsub.s32 %v646, %v648
    %v650 = vrot.slane %v412, %v649
    %v651 = vadd.s32 %v646, 4294967288
    %v652 = vlaneseq
    %v653 = vshrl.u32 %v652, 7
    %v654 = vsub.s32 %v651, %v653
    %v655 = vrot.slane %v414, %v654
    %vm656 = vcmask 130112
    %v657 = vsel %vm656, %v655, %v650
    %v658 = vlaneseq
    %v659 = vshrl.u32 %v658, 7
    %v660 = vsub.s32 %v646, %v659
    %v661 = vrot.slane %v416, %v660
    %v662 = vlaneseq
    %v663 = vshrl.u32 %v662, 7
    %v664 = vsub.s32 %v651, %v663
    %v665 = vrot.slane %v418, %v664
    %v666 = vsel %vm656, %v665, %v661
    %vm667 = vcmask 1041409
    %v668 = vsel %vm667, %v666, %v657
    %vm670 = vcmask 123904
    %671 = vst.msk [vmem:[#allocation15] sm:$0x3] %vm670, %v668
    %672 = vst.msk [vmem:[#allocation16] sm:$0xff] %vm139, %v623
    %673 = vst.msk [vmem:[#allocation16 + $0x8] sm:$0xff] %vm139, %v628
    %674 = vst.msk [vmem:[#allocation16 + $0x10] sm:$0xff] %vm139, %v633
    %675 = vst.msk [vmem:[#allocation16 + $0x18] sm:$0xff] %vm139, %v638
    // Predicated region
    $region74: #{tpu_custom_call.1} parent=1 // pred_check
      _
    $region75: #{tpu_custom_call.1} parent=1 // pred_check_branch
      %677 = sbr.rel (0) target = $region77
    $region76: #{tpu_custom_call.1} parent=1 // pred_region
      %s679 = ssub.s32 32, 32
      %680 = vsyncadd [#allocation5], %s679
      %s682 = sshll.u32 [#allocation15], 4
      %s683 = int_to_ptr.vmem [resolvable:$true] %s682
      %685 = dma.vmem_to_hbm [thread:$0]  %s683, 32, %s11, [#allocation5]
    $region77: #{tpu_custom_call.1} parent=1 // pred_fallthru
      _
    // Predicated region
    $region78: #{tpu_custom_call.1} parent=1 // pred_check
      _
    $region79: #{tpu_custom_call.1} parent=1 // pred_check_branch
      %687 = sbr.rel (0) target = $region81
    $region80: #{tpu_custom_call.1} parent=1 // pred_region
      %s689 = ssub.s32 512, 512
      %690 = vsyncadd [#allocation17], %s689
      %s691 = sshll.u32 [#allocation16], 4
      %s692 = int_to_ptr.vmem [resolvable:$true] %s691
      %697 = dma.vmem_to_hbm [thread:$0]  %s692, 512, %s12, [#allocation17], 128, 128, 8
    $region81: #{tpu_custom_call.1} parent=1 // pred_fallthru
      _
    // Predicated region
    $region82: #{tpu_custom_call.1} parent=1 // pred_check
      _
    $region83: #{tpu_custom_call.1} parent=1 // pred_check_branch
      %699 = sbr.rel (0) target = $region85
    $region84: #{tpu_custom_call.1} parent=1 // pred_region
      %700 = dma.done [#allocation5], 32
    $region85: #{tpu_custom_call.1} parent=1 // pred_fallthru
      _
    // Predicated region
    $region86: #{tpu_custom_call.1} parent=1 // pred_check
      _
    $region87: #{tpu_custom_call.1} parent=1 // pred_check_branch
      %702 = sbr.rel (0) target = $region89
    $region88: #{tpu_custom_call.1} parent=1 // pred_region
      %703 = dma.done [#allocation17], 512
    $region89: #{tpu_custom_call.1} parent=1 // pred_fallthru
      _
    %704 = vsyncpa [#allocation4], 1
    %705 = vsyncpa [#allocation7], 1
    %706 = vsyncpa [#allocation10], 1
    %707 = vsyncpa [#allocation13], 1
    %708 = vsyncpa [#allocation5], 1
    %709 = vsyncpa [#allocation17], 1

</llo_original>
